<compile_context>
chip_gen: v5e
topology: v5e:2x2
jax: 0.10.0
libtpu: 0.0.40
codegen_flags: <defaults>
</compile_context>

<pallas_src>
import functools

import numpy as np
import jax
import jax.numpy as jnp
from jax.experimental import pallas as pl
from jax.experimental.pallas import tpu as pltpu


_VMEM = pl.BlockSpec(memory_space=pltpu.MemorySpace.VMEM)


def _vmem_limit_bytes():
    cap = 64 * 1024 * 1024
    try:
        info = pltpu.get_tpu_info()
        cap = int(getattr(info, "vmem_capacity_bytes", cap) or cap)
    except Exception:
        pass
    return max(48 * 1024 * 1024, min(cap * 7 // 8, 112 * 1024 * 1024))


def _use_roll(m):
    """Lane rotation is only used when the lane count is a multiple of 128."""
    return m >= 128 and m % 128 == 0


# ----------------------------------------------------------------------------
# pltpu.roll shift-direction probe (so taps unambiguously fetch x[p + s]).
# Probed once per process on the actual device; only consulted at trace time.
# ----------------------------------------------------------------------------
_ROLL_FETCH_NEG = None


def _init_roll_convention():
    global _ROLL_FETCH_NEG
    if _ROLL_FETCH_NEG is not None:
        return

    def probe(x_ref, o_ref):
        o_ref[...] = pltpu.roll(x_ref[...], 1, 1)

    x = jnp.arange(128, dtype=jnp.float32).reshape(1, 128)
    y = pl.pallas_call(
        probe,
        out_shape=jax.ShapeDtypeStruct((1, 128), jnp.float32),
        in_specs=[_VMEM], out_specs=_VMEM,
    )(x)
    # jnp.roll convention -> y[0, 1] == 0 ; opposite convention -> y[0, 1] == 2
    _ROLL_FETCH_NEG = bool(abs(float(jax.device_get(y)[0, 1])) < 0.5)


def _fetch_shift(s, m):
    """Shift arg for pltpu.roll so that result[..., p] == x[..., (p + s) % m]."""
    if _ROLL_FETCH_NEG is None:
        _init_roll_convention()
    return (-s) % m if _ROLL_FETCH_NEG else s % m


# ----------------------------------------------------------------------------
# The single fused kernel: the whole U-Net forward in one pallas_call.
# All refs are whole-block VMEM residents; static config bound via partial.
# ----------------------------------------------------------------------------
def _unet_kernel(x_ref, *refs, names, N, H, W):
    bf16, f32 = jnp.bfloat16, jnp.float32
    o_ref = refs[-1]
    r = dict(zip(names, refs[:-1]))

    # -------- fused building blocks (values are (C, m), m = N*h*w) --------
    def conv(x, wname, h, w, relu=True):
        """3x3 same-padded conv (+bias, +ReLU) as ONE tap-stacked MXU matmul."""
        cin, m = x.shape
        xb = x.astype(bf16)
        masks = None
        if _use_roll(m) and (h > 1 or w > 1):
            masks = r["mask%d" % m][...]           # (9, m) f32 boundary masks
        pieces = []
        for t in range(9):
            dy, dx = t // 3 - 1, t % 3 - 1
            if dy == 0 and dx == 0:
                pieces.append(xb)                                   # centre tap
            elif (dy != 0 and h < 2) or (dx != 0 and w < 2):
                pieces.append(jnp.zeros((cin, m), bf16))            # all padding
            elif _use_roll(m):
                s = dy * w + dx
                shifted = pltpu.roll(x, _fetch_shift(s, m), 1)
                pieces.append((shifted * masks[t:t + 1, :]).astype(bf16))
            else:
                # small resolution: shift + boundary mask folded into one 0/1 matmul
                tap = jnp.dot(xb, r["tmat%d" % m][t],
                              preferred_element_type=f32)
                pieces.append(tap.astype(bf16))
        slab = jnp.concatenate(pieces, axis=0)      # (9*cin, m) bf16 tap slab
        y = jnp.dot(r[wname + "_w"][...], slab,
                    preferred_element_type=f32) + r[wname + "_b"][...]
        return jnp.maximum(y, 0.0) if relu else y

    def pool(x):
        """2x2 stride-2 max pool: max over 4 per-offset 0/1 gather matmuls."""
        m_in = x.shape[-1]
        xb = x.astype(bf16)
        out = None
        for k in range(4):
            y = jnp.dot(xb, r["pool%d" % m_in][k], preferred_element_type=f32)
            out = y if out is None else jnp.maximum(out, y)
        return out

    def upconv(z, name):
        """ConvTranspose2d(k=2, s=2): one stacked matmul + 4 0/1 scatter matmuls."""
        y = jnp.dot(r[name + "_w"][...], z.astype(bf16),
                    preferred_element_type=f32) + r[name + "_b"][...]
        yb = y.astype(bf16)                         # (4*Cout, m_in)
        cout = y.shape[0] // 4
        out = None
        for t in range(4):
            o = jnp.dot(yb[t * cout:(t + 1) * cout, :], r[name + "_scat"][t],
                        preferred_element_type=f32)
            out = o if out is None else out + o
        return out                                  # (Cout, 4*m_in) f32

    def dec_block(z, skip, up_name, blk, h, w):
        up = upconv(z, up_name)
        # skip-connection concat = channel-stacked tap slab (no concat op in HBM)
        comb = jnp.concatenate([up, skip], axis=0)
        hmid = conv(comb, blk + "a", h, w)
        return conv(hmid, blk + "b", h, w)

    # -------------------------------- encoder --------------------------------
    xb = x_ref[...].astype(bf16)
    h0 = jnp.dot(r["init_w"][...], xb, preferred_element_type=f32) + r["init_b"][...]
    h0 = jnp.maximum(h0, 0.0)          # (16, M) f32; channels 3..15 are zero pad
    enc1 = conv(h0, "conv1", H, W)
    enc2 = conv(pool(enc1), "conv2", H // 2, W // 2)
    enc3 = conv(conv(pool(enc2), "conv3", H // 4, W // 4),
                "conv3s", H // 4, W // 4)
    enc4 = conv(conv(pool(enc3), "conv4", H // 8, W // 8),
                "conv4s", H // 8, W // 8)
    center = conv(conv(pool(enc4), "cen1", H // 16, W // 16),
                  "cen2", H // 16, W // 16)

    # -------------------------------- decoder --------------------------------
    d4 = dec_block(center, enc4, "up4", "dec4", H // 8, W // 8)
    d3 = dec_block(d4, enc3, "up3", "dec3", H // 4, W // 4)
    d2 = dec_block(d3, enc2, "up2", "dec2", H // 2, W // 2)
    d1 = dec_block(d2, enc1, "up1", "dec1", H, W)

    # final 1x1 conv (no ReLU), lane-dense (out_ch, M) store
    o_ref[...] = (jnp.dot(r["out_w"][...], d1.astype(bf16),
                          preferred_element_type=f32) + r["out_b"][...])


# ----------------------------------------------------------------------------
# Forward pass wrapper: NCHW <-> (C, N*H*W) glue + one pallas_call.
# ----------------------------------------------------------------------------
def unet_forward(x_nchw, q):
    N, cin, H, W = x_nchw.shape
    assert H % 16 == 0 and W % 16 == 0
    M = N * H * W
    assert ("pool%d" % M) in q, "packed params built for a different input shape"
    oc = q["out_w"].shape[0]
    x2d = jnp.transpose(x_nchw, (1, 0, 2, 3)).reshape(cin, M)

    names = tuple(sorted(q.keys()))
    kernel = functools.partial(_unet_kernel, names=names, N=N, H=H, W=W)
    out = pl.pallas_call(
        kernel,
        out_shape=jax.ShapeDtypeStruct((oc, M), jnp.float32),
        in_specs=[_VMEM] * (1 + len(names)),
        out_specs=_VMEM,
        compiler_params=pltpu.CompilerParams(
            vmem_limit_bytes=_vmem_limit_bytes()),
    )(x2d, *(q[k] for k in names))
    return jnp.transpose(out.reshape(oc, N, H, W), (1, 0, 2, 3))


# ----------------------------------------------------------------------------
# Pack-time 0/1 constants (built once in numpy, tiny at toy sizes).
# ----------------------------------------------------------------------------
def _make_conv_masks(N, H, W):
    """(9, N*H*W) f32 boundary masks for the lane-roll tap path."""
    M = N * H * W
    pos = np.arange(M)
    row = (pos % (H * W)) // W
    col = pos % W
    masks = np.zeros((9, M), np.float32)
    for t in range(9):
        dy, dx = t // 3 - 1, t % 3 - 1
        masks[t] = ((row + dy >= 0) & (row + dy < H) &
                    (col + dx >= 0) & (col + dx < W)).astype(np.float32)
    return jnp.asarray(masks)


def _make_conv_tmats(N, H, W):
    """(9, m, m) bf16 shift+mask matrices: tap_t = x @ T[t] (small resolutions)."""
    m = N * H * W
    pos = np.arange(m)
    row = (pos % (H * W)) // W
    col = pos % W
    T = np.zeros((9, m, m), np.float32)
    for t in range(9):
        dy, dx = t // 3 - 1, t % 3 - 1
        s = dy * W + dx
        for p in range(m):
            if 0 <= row[p] + dy < H and 0 <= col[p] + dx < W:
                T[t, p + s, p] = 1.0
    return jnp.asarray(T, jnp.bfloat16)


def _make_pool_gathers(N, H, W):
    """(4, N*H*W, N*(H/2)*(W/2)) bf16 gathers; pool = max_k (x @ g[k])."""
    ho, wo = H // 2, W // 2
    g = np.zeros((4, N * H * W, N * ho * wo), np.float32)
    for k in range(4):
        ky, kx = k // 2, k % 2
        for n in range(N):
            for i in range(ho):
                for j in range(wo):
                    g[k, (n * H + 2 * i + ky) * W + 2 * j + kx,
                      (n * ho + i) * wo + j] = 1.0
    return jnp.asarray(g, jnp.bfloat16)


def _make_up_scat(N, h, w):
    """(4, N*h*w, N*(2h)*(2w)) bf16 scatter matrices for the 2x2 sub-pixels."""
    scat = np.zeros((4, N * h * w, N * 4 * h * w), np.float32)
    for t in range(4):
        ky, kx = t // 2, t % 2
        for n in range(N):
            for i in range(h):
                for j in range(w):
                    scat[t, (n * h + i) * w + j,
                         (n * 2 * h + 2 * i + ky) * (2 * w) + 2 * j + kx] = 1.0
    return jnp.asarray(scat, jnp.bfloat16)


# ----------------------------------------------------------------------------
# Parameter packing (done once, outside the forward).
# ----------------------------------------------------------------------------
def pack_params(p, N, H, W):
    bf16 = jnp.bfloat16

    def cw(w):   # (3,3,Ci,Co) -> (Co, 9*Ci) bf16 ; K index = (ky*3+kx)*Ci + ci
        co, ci = w.shape[3], w.shape[2]
        return jnp.transpose(w, (3, 0, 1, 2)).reshape(co, 9 * ci).astype(bf16)

    def uw(w):   # (2,2,Ci,Co) -> (4*Co, Ci) bf16 ; row index = (ky*2+kx)*Co + co
        co, ci = w.shape[3], w.shape[2]
        return jnp.transpose(w, (0, 1, 3, 2)).reshape(4 * co, ci).astype(bf16)

    def bc(b):   # (Co,) -> (Co, 1) f32
        return b.reshape(-1, 1).astype(jnp.float32)

    q = {}
    # init 1x1 conv: output channels padded 3 -> 16 (zero weights / biases) so
    # the stem tap slab stays aligned to the 16-row bf16 sublane tile.
    q["init_w"] = jnp.pad(jnp.transpose(p["init_w"]), ((0, 13), (0, 0))).astype(bf16)
    q["init_b"] = bc(jnp.pad(p["init_b"], (0, 13)))
    w1 = jnp.pad(p["conv1"][0], ((0, 0), (0, 0), (0, 13), (0, 0)))   # Cin 3 -> 16
    q["conv1_w"], q["conv1_b"] = cw(w1), bc(p["conv1"][1])
    for name in ("conv2", "conv3", "conv3s", "conv4", "conv4s"):
        w, b = p[name]
        q[name + "_w"], q[name + "_b"] = cw(w), bc(b)
    q["cen1_w"], q["cen1_b"] = cw(p["center"]["w1"]), bc(p["center"]["b1"])
    q["cen2_w"], q["cen2_b"] = cw(p["center"]["w2"]), bc(p["center"]["b2"])
    for name in ("dec4", "dec3", "dec2", "dec1"):
        blk = p[name]
        q[name + "a_w"], q[name + "a_b"] = cw(blk["w1"]), bc(blk["b1"])
        q[name + "b_w"], q[name + "b_b"] = cw(blk["w2"]), bc(blk["b2"])
    for name in ("up4", "up3", "up2", "up1"):
        w, b = p[name]
        q[name + "_w"] = uw(w)
        q[name + "_b"] = bc(jnp.tile(b, 4))
    q["out_w"] = jnp.transpose(p["out_w"]).astype(bf16)
    q["out_b"] = bc(p["out_b"])

    # resolution-dependent 0/1 constants
    for k in range(5):
        h, w = H >> k, W >> k
        m = N * h * w
        if h > 1 or w > 1:
            if _use_roll(m):
                q["mask%d" % m] = _make_conv_masks(N, h, w)
            else:
                q["tmat%d" % m] = _make_conv_tmats(N, h, w)
    for k in range(4):
        h, w = H >> k, W >> k
        q["pool%d" % (N * h * w)] = _make_pool_gathers(N, h, w)
    q["up4_scat"] = _make_up_scat(N, H >> 4, W >> 4)
    q["up3_scat"] = _make_up_scat(N, H >> 3, W >> 3)
    q["up2_scat"] = _make_up_scat(N, H >> 2, W >> 2)
    q["up1_scat"] = _make_up_scat(N, H >> 1, W >> 1)
    return q


# ----------------------------------------------------------------------------
# Deterministic synthetic parameters (shapes follow the module __init__).
# ----------------------------------------------------------------------------
def init_params(key, in_ch, out_ch):
    keys = iter(jax.random.split(key, 128))

    def w3(cin, cout):
        std = (2.0 / (9.0 * cin)) ** 0.5
        return jax.random.normal(next(keys), (3, 3, cin, cout), jnp.float32) * std

    def w1(cin, cout):
        std = (2.0 / cin) ** 0.5
        return jax.random.normal(next(keys), (cin, cout), jnp.float32) * std

    def wup(cin, cout):
        std = (2.0 / (4.0 * cin)) ** 0.5
        return jax.random.normal(next(keys), (2, 2, cin, cout), jnp.float32) * std

    def bias(c):
        return jax.random.normal(next(keys), (c,), jnp.float32) * 0.01

    def blk(cin, cmid, cout):
        return {"w1": w3(cin, cmid), "b1": bias(cmid),
                "w2": w3(cmid, cout), "b2": bias(cout)}

    p = {}
    p["init_w"], p["init_b"] = w1(in_ch, 3), bias(3)
    p["conv1"] = (w3(3, 64), bias(64))
    p["conv2"] = (w3(64, 128), bias(128))
    p["conv3"] = (w3(128, 256), bias(256))
    p["conv3s"] = (w3(256, 256), bias(256))
    p["conv4"] = (w3(256, 512), bias(512))
    p["conv4s"] = (w3(512, 512), bias(512))
    p["center"] = blk(512, 512, 512)
    p["dec4"] = blk(512 + 256, 512, 256)
    p["dec3"] = blk(256 + 128, 256, 128)
    p["dec2"] = blk(128 + 64, 128, 64)
    p["dec1"] = blk(64 + 32, 64, 32)
    p["up4"] = (wup(512, 256), bias(256))
    p["up3"] = (wup(256, 128), bias(128))
    p["up2"] = (wup(128, 64), bias(64))
    p["up1"] = (wup(64, 32), bias(32))
    p["out_w"], p["out_b"] = w1(32, out_ch), bias(out_ch)
    return p


# ----------------------------------------------------------------------------
# Pure-JAX reference (same bf16 weight/activation rounding) for verification.
# ----------------------------------------------------------------------------
def unet_reference(x_nchw, p):
    f32, bf16 = jnp.float32, jnp.bfloat16

    def conv1x1(x, w, b, relu):
        y = jnp.einsum("nhwc,cd->nhwd", x.astype(bf16), w.astype(bf16),
                       preferred_element_type=f32) + b
        return jnp.maximum(y, 0.0) if relu else y

    def conv3x3(x, wb):
        w, b = wb
        y = jax.lax.conv_general_dilated(
            x.astype(bf16), w.astype(bf16), (1, 1), ((1, 1), (1, 1)),
            dimension_numbers=("NHWC", "HWIO", "NHWC"),
            preferred_element_type=f32)
        return jnp.maximum(y + b, 0.0)

    def block(x, bp):
        return conv3x3(conv3x3(x, (bp["w1"], bp["b1"])), (bp["w2"], bp["b2"]))

    def pool(x):
        n, h, w, c = x.shape
        return jnp.max(x.reshape(n, h // 2, 2, w // 2, 2, c), axis=(2, 4))

    def upconv(x, wb):
        w, b = wb
        n, h, ww, _ = x.shape
        co = w.shape[-1]
        out = jnp.zeros((n, 2 * h, 2 * ww, co), f32)
        xb = x.astype(bf16)
        for ky in range(2):
            for kx in range(2):
                y = jnp.einsum("nhwc,cd->nhwd", xb, w[ky, kx].astype(bf16),
                               preferred_element_type=f32)
                out = out.at[:, ky::2, kx::2, :].set(y)
        return out + b

    x = jnp.transpose(x_nchw, (0, 2, 3, 1))
    h0 = conv1x1(x, p["init_w"], p["init_b"], True)
    enc1 = conv3x3(h0, p["conv1"])
    enc2 = conv3x3(pool(enc1), p["conv2"])
    enc3 = conv3x3(conv3x3(pool(enc2), p["conv3"]), p["conv3s"])
    enc4 = conv3x3(conv3x3(pool(enc3), p["conv4"]), p["conv4s"])
    center = block(pool(enc4), p["center"])
    d4 = block(jnp.concatenate([upconv(center, p["up4"]), enc4], -1), p["dec4"])
    d3 = block(jnp.concatenate([upconv(d4, p["up3"]), enc3], -1), p["dec3"])
    d2 = block(jnp.concatenate([upconv(d3, p["up2"]), enc2], -1), p["dec2"])
    d1 = block(jnp.concatenate([upconv(d2, p["up1"]), enc1], -1), p["dec1"])
    out = conv1x1(d1, p["out_w"], p["out_b"], False)
    return jnp.transpose(out, (0, 3, 1, 2))


if __name__ == "__main__":
    _init_roll_convention()

    key = jax.random.PRNGKey(0)
    pkey, xkey = jax.random.split(key)
    in_ch, out_ch = 4, 2
    N, H, W = 2, 16, 16

    raw = init_params(pkey, in_ch, out_ch)
    packed = pack_params(raw, N, H, W)
    x = jax.random.normal(xkey, (N, in_ch, H, W), jnp.float32)

    fwd = jax.jit(unet_forward)
    y = fwd(x, packed)
    jax.block_until_ready(y)

    assert y.shape == (N, out_ch, H, W), y.shape
    assert bool(jnp.all(jnp.isfinite(y)))

    # numerical cross-check against a pure-JAX reference using the same bf16
    # weight/activation rounding (generous tolerance: only catches gross bugs)
    ref = jax.jit(unet_reference)(x, raw)
    err = float(jnp.max(jnp.abs(y - ref)))
    scale = float(jnp.max(jnp.abs(ref)))
    assert err <= 0.1 * scale + 0.1, (err, scale)

    print("KERNEL_OK")
</pallas_src>

<mosaic_0001>
module attributes {stable_mosaic.version = 11 : i64} {
  func.func @probe(%arg0: memref<1x128xf32, #tpu.memory_space<vmem>>, %arg1: memref<1x128xf32, #tpu.memory_space<vmem>>) attributes {dimension_semantics = [], scalar_prefetch = 0 : i64, scratch_operands = 0 : i64, tpu.core_type = #tpu.core_type<tc>} {
    %c0 = arith.constant 0 : index
    %c0_0 = arith.constant 0 : index
    %0 = vector.load %arg0[%c0, %c0_0] : memref<1x128xf32, #tpu.memory_space<vmem>>, vector<1x128xf32>
    %c1_i32 = arith.constant 1 : i32
    %1 = tpu.dynamic_rotate %0 by %c1_i32 dim 1 : vector<1x128xf32>, i32 -> vector<1x128xf32>
    %c0_1 = arith.constant 0 : index
    %c0_2 = arith.constant 0 : index
    %2 = vector.load %arg1[%c0_1, %c0_2] : memref<1x128xf32, #tpu.memory_space<vmem>>, vector<1x128xf32>
    tpu.vector_store %arg1[%c0_1, %c0_2], %1 {strides = array<i32>} : memref<1x128xf32, #tpu.memory_space<vmem>>, vector<1x128xf32>,
    return
  }
}

</mosaic_0001>

<llo_original>
// kernel: tpu_custom_call.1
$region0: #{tpu_custom_call.1}
  #allocation0 [shape = 'u32[]', space=smem, size = 0x4, offset = 0x4, fixed_abs, tag = 'smem constant byte address 0x4 - core index']
  #allocation1 [shape = 'u32[72,128]{1,0:T(1,128)}', space=vmem, size = 0x9000, scoped, tag = 'internal scratch']
  %s0 = inlined_call_operand.hbm [shape: f32[1,128], index: 0, kind: input, shape index: {}]
  %s1 = inlined_call_operand.hbm [shape: f32[1,128], index: 1, kind: output, shape index: {}]
  %s2 = sld [smem:[#allocation0]]
  $region18: #{tpu_custom_call.1} parent=0
    _
  %s4 = ssub.s32 1, %s2
  %s5 = scalar_select 0, %s4, %s2
  $region1: #{tpu_custom_call.1} parent=0
    #allocation2 [shape = 'u8[512]{0}', space=vmem, size = 0x400, scoped, tag = 'input window, operand 0, single buffered']
    #allocation3 [shape = 's32[1]{0}', space=sflag, size = 0x4, scoped, tag = 'scoped memory for tpu_custom_call.1']
    #allocation4 [shape = 's32[1]{0}', space=sflag, size = 0x4, scoped, tag = 'scoped memory for tpu_custom_call.1']
    #allocation5 [shape = 'u8[512]{0}', space=vmem, size = 0x400, scoped, tag = 'output window, operand 0, single buffered']
    %6 = vsyncpa [#allocation3], 0
    %7 = vsyncpa [#allocation4], 0
    // Predicated region
    $region2: #{tpu_custom_call.1} parent=1 // pred_check
      _
    $region3: #{tpu_custom_call.1} parent=1 // pred_check_branch
      %9 = sbr.rel (0) target = $region5
    $region4: #{tpu_custom_call.1} parent=1 // pred_region
      %11 = vsyncadd [#allocation3], 0
      %s13 = sshll.u32 %s0, 4
      %s14 = int_to_ptr.hbm [resolvable:$true] %s13
      %s15 = sshll.u32 [#allocation2], 4
      %s16 = int_to_ptr.vmem [resolvable:$true] %s15
      %18 = dma.hbm_to_vmem [thread:$0]  %s14, 16, %s16, [#allocation3]
    $region5: #{tpu_custom_call.1} parent=1 // pred_fallthru
      _
    // Predicated region
    $region6: #{tpu_custom_call.1} parent=1 // pred_check
      _
    $region7: #{tpu_custom_call.1} parent=1 // pred_check_branch
      %20 = sbr.rel (0) target = $region9
    $region8: #{tpu_custom_call.1} parent=1 // pred_region
      %22 = dma.done [#allocation3], 16
    $region9: #{tpu_custom_call.1} parent=1 // pred_fallthru
      _
    %v23 = vld [vmem:[#allocation2] sm:$0x1]
    %24 = vrot.lane.b32.xlu0 %v23, 1
    %v25 = vpop.permute.xlu0 %24
    %26 = vst [vmem:[#allocation5] sm:$0x1] %v25
    // Predicated region
    $region10: #{tpu_custom_call.1} parent=1 // pred_check
      _
    $region11: #{tpu_custom_call.1} parent=1 // pred_check_branch
      %28 = sbr.rel (0) target = $region13
    $region12: #{tpu_custom_call.1} parent=1 // pred_region
      %30 = vsyncadd [#allocation4], 0
      %s32 = sshll.u32 [#allocation5], 4
      %s33 = int_to_ptr.vmem [resolvable:$true] %s32
      %s34 = sshll.u32 %s1, 4
      %s35 = int_to_ptr.hbm [resolvable:$true] %s34
      %37 = dma.vmem_to_hbm [thread:$0]  %s33, 16, %s35, [#allocation4]
    $region13: #{tpu_custom_call.1} parent=1 // pred_fallthru
      _
    // Predicated region
    $region14: #{tpu_custom_call.1} parent=1 // pred_check
      _
    $region15: #{tpu_custom_call.1} parent=1 // pred_check_branch
      %39 = sbr.rel (0) target = $region17
    $region16: #{tpu_custom_call.1} parent=1 // pred_region
      %41 = dma.done [#allocation4], 16
    $region17: #{tpu_custom_call.1} parent=1 // pred_fallthru
      _
    %42 = vsyncpa [#allocation3], 1
    %43 = vsyncpa [#allocation4], 1

</llo_original>
